<compile_context>
chip_gen: v6e
topology: v6e:2x2x1
jax: 0.10.0
libtpu: 0.0.40
codegen_flags: <defaults>
</compile_context>

<pallas_src>
import functools

import jax
import jax.numpy as jnp
from jax.experimental import pallas as pl
from jax.experimental.pallas import tpu as pltpu


def _decoder_kernel(x_ref, w1_ref, b1_ref, w2_ref, b2_ref, o_ref, *, approx_sigmoid):
    # Cast the x tile to the matmul dtype *inside* the kernel: x is read from HBM once
    # in its original dtype and the convert is fused (no extra wrapper-side XLA pass).
    x = x_ref[...].astype(w1_ref.dtype)
    # hidden = relu(x @ W1 + b1)  — MXU accumulates f32; bias add / ReLU stay f32.
    h = jnp.dot(x, w1_ref[...], preferred_element_type=jnp.float32)
    h = jnp.maximum(h + b1_ref[...], 0.0)                 # (tb, H) + (1, H) broadcast
    h = h.astype(w2_ref.dtype)                            # feed MXU same dtype as W2
    # out = sigmoid(h @ W2 + b2);  sigmoid = 1 / (1 + exp(-y)) keeps exp + recip on EUP.
    y = jnp.dot(h, w2_ref[...], preferred_element_type=jnp.float32) + b2_ref[...]
    o_ref[...] = pl.reciprocal(1.0 + jnp.exp(-y), approx=approx_sigmoid).astype(o_ref.dtype)


def final_ladder_decoder(x, w1, b1, w2, b2, *, tb=2048, use_bf16_matmul=True,
                         out_dtype=None):
    """x: (B, Z)  w1: (Z, H)  b1: (1, H)  w2: (H, D)  b2: (1, D)  ->  (B, D)."""
    B, Z = x.shape
    H = w1.shape[1]
    D = w2.shape[1]
    if out_dtype is None:
        out_dtype = x.dtype

    # Weight/bias casts are tiny one-time ops; x is cast inside the kernel (see above).
    if use_bf16_matmul:
        w1 = w1.astype(jnp.bfloat16)
        w2 = w2.astype(jnp.bfloat16)

    # Batch tile: large enough to amortize the ~0.35 us per-grid-step overhead, but
    # capped so the grid keeps >= 2 "parallel" steps whenever possible (both v7x
    # TensorCores busy).  B does NOT have to be a multiple of the tile — Pallas masks
    # the ragged last block's output stores.
    align = 16                                   # bf16 sublane packing / f32-safe
    tb = max(align, (tb // align) * align)
    half_b = max(align, pl.cdiv(pl.cdiv(B, 2), align) * align)
    tb_eff = min(tb, half_b)
    if tb_eff >= B:
        tb_eff = B                               # single full-extent block (always legal)
    grid = (pl.cdiv(B, tb_eff),)

    flops = 2 * B * (Z * H + H * D)
    bytes_accessed = (x.size * x.dtype.itemsize
                      + B * D * jnp.dtype(out_dtype).itemsize
                      + w1.size * w1.dtype.itemsize + w2.size * w2.dtype.itemsize
                      + b1.size * b1.dtype.itemsize + b2.size * b2.dtype.itemsize)

    kernel = functools.partial(_decoder_kernel, approx_sigmoid=use_bf16_matmul)

    return pl.pallas_call(
        kernel,
        out_shape=jax.ShapeDtypeStruct((B, D), out_dtype),
        grid_spec=pltpu.PrefetchScalarGridSpec(
            num_scalar_prefetch=0,
            grid=grid,
            in_specs=[
                pl.BlockSpec((tb_eff, Z), lambda i: (i, 0)),   # x tile (streams over B)
                pl.BlockSpec((Z, H), lambda i: (0, 0)),        # W1 (resident, tiny)
                pl.BlockSpec((1, H), lambda i: (0, 0)),        # b1 (f32)
                pl.BlockSpec((H, D), lambda i: (0, 0)),        # W2 (resident, tiny)
                pl.BlockSpec((1, D), lambda i: (0, 0)),        # b2 (f32)
            ],
            out_specs=pl.BlockSpec((tb_eff, D), lambda i: (i, 0)),  # lane-dense (D=128)
        ),
        compiler_params=pltpu.CompilerParams(
            dimension_semantics=("parallel",)),   # batch tiles shard across TCs (v7x)
        cost_estimate=pl.CostEstimate(
            flops=flops, transcendentals=B * D, bytes_accessed=bytes_accessed),
    )(x, w1, b1, w2, b2)


def init_params(key, z_final, hidden_dim, input_dim, dtype=jnp.float32):
    """Deterministic init mimicking nn.Linear's U(-1/sqrt(fan_in), 1/sqrt(fan_in))."""
    k1, k2, k3, k4 = jax.random.split(key, 4)
    lim1 = 1.0 / (z_final ** 0.5)
    lim2 = 1.0 / (hidden_dim ** 0.5)
    # stored as (in, out) = transpose of PyTorch's (out, in) weight
    w1 = jax.random.uniform(k1, (z_final, hidden_dim), dtype, -lim1, lim1)
    b1 = jax.random.uniform(k2, (1, hidden_dim), dtype, -lim1, lim1)
    w2 = jax.random.uniform(k3, (hidden_dim, input_dim), dtype, -lim2, lim2)
    b2 = jax.random.uniform(k4, (1, input_dim), dtype, -lim2, lim2)
    return w1, b1, w2, b2


def reference(x, w1, b1, w2, b2):
    h = jnp.maximum(x @ w1 + b1, 0.0)
    return jax.nn.sigmoid(h @ w2 + b2)


if __name__ == "__main__":
    # Shapes implied by the module: z_final=32, hidden=64, input_dim=128.
    # B=300 exercises the ragged last block and yields a 2-step "parallel" grid.
    B, Z, H, D = 300, 32, 64, 128
    key = jax.random.PRNGKey(0)
    kx, kp = jax.random.split(key)
    x = jax.random.normal(kx, (B, Z), jnp.float32)
    w1, b1, w2, b2 = init_params(kp, Z, H, D)

    ref = reference(x, w1, b1, w2, b2)

    # Exact path: f32 matmuls, exact reciprocal — closely matches the JAX reference.
    out_f32 = jax.block_until_ready(
        final_ladder_decoder(x, w1, b1, w2, b2, use_bf16_matmul=False))
    assert out_f32.shape == (B, D)
    assert jnp.allclose(out_f32, ref, atol=1e-4, rtol=1e-4), "f32 mismatch vs reference"

    # Default fast path: bf16 MXU operands (cast in-kernel), f32 accumulation/elementwise.
    out_fast = jax.block_until_ready(final_ladder_decoder(x, w1, b1, w2, b2))
    assert out_fast.shape == (B, D)
    assert float(jnp.max(jnp.abs(out_fast.astype(jnp.float32) - ref))) < 2e-2, \
        "bf16-operand mismatch vs reference"

    # Optional reduced-precision output (halves the dominant output-write traffic).
    out_bf16 = jax.block_until_ready(
        final_ladder_decoder(x, w1, b1, w2, b2, out_dtype=jnp.bfloat16))
    assert out_bf16.dtype == jnp.bfloat16 and out_bf16.shape == (B, D)
    assert float(jnp.max(jnp.abs(out_bf16.astype(jnp.float32) - ref))) < 3e-2, \
        "bf16-output mismatch vs reference"

    print("KERNEL_OK")
</pallas_src>

<mosaic_0001>
module attributes {stable_mosaic.version = 11 : i64} {
  func.func @_decoder_kernel(%arg0: i32, %arg1: memref<160x32xf32, #tpu.memory_space<vmem>>, %arg2: memref<32x64xf32, #tpu.memory_space<vmem>>, %arg3: memref<1x64xf32, #tpu.memory_space<vmem>>, %arg4: memref<64x128xf32, #tpu.memory_space<vmem>>, %arg5: memref<1x128xf32, #tpu.memory_space<vmem>>, %arg6: memref<160x128xf32, #tpu.memory_space<vmem>>) attributes {dimension_semantics = [#tpu.dimension_semantics<parallel>], iteration_bounds = array<i64: 2>, scalar_prefetch = 0 : i64, scratch_operands = 0 : i64, tpu.core_type = #tpu.core_type<tc>, window_params = [{transform_indices = @transform_0, window_bounds = array<i64: 160, 32>}, {pipeline_mode = #tpu.pipeline_mode<synchronous>, transform_indices = @transform_1, window_bounds = array<i64: 32, 64>}, {pipeline_mode = #tpu.pipeline_mode<synchronous>, transform_indices = @transform_2, window_bounds = array<i64: 1, 64>}, {pipeline_mode = #tpu.pipeline_mode<synchronous>, transform_indices = @transform_3, window_bounds = array<i64: 64, 128>}, {pipeline_mode = #tpu.pipeline_mode<synchronous>, transform_indices = @transform_4, window_bounds = array<i64: 1, 128>}, {transform_indices = @transform_5, window_bounds = array<i64: 160, 128>}]} {
    %c0 = arith.constant 0 : index
    %c0_0 = arith.constant 0 : index
    %0 = vector.load %arg1[%c0, %c0_0] : memref<160x32xf32, #tpu.memory_space<vmem>>, vector<160x32xf32>
    %c0_1 = arith.constant 0 : index
    %c0_2 = arith.constant 0 : index
    %1 = vector.load %arg2[%c0_1, %c0_2] : memref<32x64xf32, #tpu.memory_space<vmem>>, vector<32x64xf32>
    %cst = arith.constant dense<0.000000e+00> : vector<160x64xf32>
    %2 = tpu.matmul %0, %1, %cst {dimension_numbers = #tpu.dot_dimension_numbers<[1], [0], [0], [1], [0, 0, 1, 1], [], []>} : vector<160x32xf32>, vector<32x64xf32>, vector<160x64xf32> -> vector<160x64xf32>
    %c0_3 = arith.constant 0 : index
    %c0_4 = arith.constant 0 : index
    %3 = vector.load %arg3[%c0_3, %c0_4] : memref<1x64xf32, #tpu.memory_space<vmem>>, vector<1x64xf32>
    %4 = vector.broadcast %3 : vector<1x64xf32> to vector<160x64xf32>
    %5 = arith.addf %2, %4 : vector<160x64xf32>
    %cst_5 = arith.constant 0.000000e+00 : f32
    %6 = vector.broadcast %cst_5 : f32 to vector<160x64xf32>
    %7 = arith.maximumf %5, %6 : vector<160x64xf32>
    %c0_6 = arith.constant 0 : index
    %c0_7 = arith.constant 0 : index
    %8 = vector.load %arg4[%c0_6, %c0_7] : memref<64x128xf32, #tpu.memory_space<vmem>>, vector<64x128xf32>
    %cst_8 = arith.constant dense<0.000000e+00> : vector<160x128xf32>
    %9 = tpu.matmul %7, %8, %cst_8 {dimension_numbers = #tpu.dot_dimension_numbers<[1], [0], [0], [1], [0, 0, 1, 1], [], []>} : vector<160x64xf32>, vector<64x128xf32>, vector<160x128xf32> -> vector<160x128xf32>
    %c0_9 = arith.constant 0 : index
    %c0_10 = arith.constant 0 : index
    %10 = vector.load %arg5[%c0_9, %c0_10] : memref<1x128xf32, #tpu.memory_space<vmem>>, vector<1x128xf32>
    %11 = vector.broadcast %10 : vector<1x128xf32> to vector<160x128xf32>
    %12 = arith.addf %9, %11 : vector<160x128xf32>
    %cst_11 = arith.constant 0.000000e+00 : f32
    %13 = vector.broadcast %cst_11 : f32 to vector<160x128xf32>
    %14 = arith.subf %13, %12 : vector<160x128xf32>
    %15 = math.exp %14 : vector<160x128xf32>
    %cst_12 = arith.constant 1.000000e+00 : f32
    %16 = vector.broadcast %cst_12 : f32 to vector<160x128xf32>
    %17 = arith.addf %16, %15 : vector<160x128xf32>
    %18 = tpu.reciprocal %17 : vector<160x128xf32> -> vector<160x128xf32>
    %c0_13 = arith.constant 0 : index
    %c0_14 = arith.constant 0 : index
    %19 = vector.load %arg6[%c0_13, %c0_14] : memref<160x128xf32, #tpu.memory_space<vmem>>, vector<160x128xf32>
    tpu.vector_store %arg6[%c0_13, %c0_14], %18 {strides = array<i32>} : memref<160x128xf32, #tpu.memory_space<vmem>>, vector<160x128xf32>,
    return
  }
  func.func @transform_0(%arg0: i32) -> (i32, i32) {
    %c0_i32 = arith.constant 0 : i32
    %c0_i32_0 = arith.constant 0 : i32
    return %arg0, %c0_i32 : i32, i32
  }
  func.func @transform_1(%arg0: i32) -> (i32, i32) {
    %c0_i32 = arith.constant 0 : i32
    %c0_i32_0 = arith.constant 0 : i32
    %c0_i32_1 = arith.constant 0 : i32
    return %c0_i32, %c0_i32_0 : i32, i32
  }
  func.func @transform_2(%arg0: i32) -> (i32, i32) {
    %c0_i32 = arith.constant 0 : i32
    %c0_i32_0 = arith.constant 0 : i32
    %c0_i32_1 = arith.constant 0 : i32
    return %c0_i32, %c0_i32_0 : i32, i32
  }
  func.func @transform_3(%arg0: i32) -> (i32, i32) {
    %c0_i32 = arith.constant 0 : i32
    %c0_i32_0 = arith.constant 0 : i32
    %c0_i32_1 = arith.constant 0 : i32
    return %c0_i32, %c0_i32_0 : i32, i32
  }
  func.func @transform_4(%arg0: i32) -> (i32, i32) {
    %c0_i32 = arith.constant 0 : i32
    %c0_i32_0 = arith.constant 0 : i32
    %c0_i32_1 = arith.constant 0 : i32
    return %c0_i32, %c0_i32_0 : i32, i32
  }
  func.func @transform_5(%arg0: i32) -> (i32, i32) {
    %c0_i32 = arith.constant 0 : i32
    %c0_i32_0 = arith.constant 0 : i32
    return %arg0, %c0_i32 : i32, i32
  }
}

</mosaic_0001>

<llo_original>
// kernel: tpu_custom_call.1
$region0: #{tpu_custom_call.1}
  #allocation0 [shape = 'u32[]', space=smem, size = 0x4, offset = 0x4, fixed_abs, tag = 'smem constant byte address 0x4 - core index']
  #allocation1 [shape = 'u32[144,128]{1,0:T(1,128)}', space=vmem, size = 0x12000, scoped, tag = 'internal scratch']
  %s0 = inlined_call_operand.vmem [shape: f32[300,32], index: 0, kind: input, shape index: {}]
  %s1 = inlined_call_operand.vmem [shape: f32[32,64], index: 1, kind: input, shape index: {}]
  %s2 = inlined_call_operand.vmem [shape: f32[1,64], index: 2, kind: input, shape index: {}]
  %s3 = inlined_call_operand.vmem [shape: f32[64,128], index: 3, kind: input, shape index: {}]
  %s4 = inlined_call_operand.vmem [shape: f32[1,128], index: 4, kind: input, shape index: {}]
  %s5 = inlined_call_operand.hbm [shape: f32[300,128], index: 5, kind: output, shape index: {}]
  %s6 = sld [smem:[#allocation0]]
  $region53: #{tpu_custom_call.1} parent=0
    _
  %s8 = ssub.s32 1, %s6
  %s9 = scalar_select 0, %s8, %s6
  $region1: #{tpu_custom_call.1} parent=0
    #allocation2 [shape = 'u8[163840]{0}', space=vmem, size = 0x28000, scoped, tag = 'output window, operand 0']
    #allocation3 [shape = 's32[2]{0}', space=sflag, size = 0x8, scoped, tag = 'scoped memory for tpu_custom_call.1']
    %10 = vsyncpa [#allocation3], 0
    %s11 = scalar_lea.sflag [#allocation3], 1
    %12 = vsyncpa %s11, 0
    loop: start=0, step=1, limit=4
    $region2: #{tpu_custom_call.1} parent=1 // loop_pre_header
      _
    $region3: #{tpu_custom_call.1} parent=1 // loop_header
      %s14 = sphi 0, %s18
      %p15 = scmp.ge.s32.totalorder %s14, 4
      %s24 = sphi 0, %s26
      %s27 = sphi 0, %s24
      %s28 = sphi 0, %s27
      %s44 = sphi 0, %s28
      %s48 = sphi 0, %s48
      %s50 = sphi 0, %s48
      %s51 = sphi 0, %s50
      %s65 = sphi 0, %s51
      %s69 = sphi 0, %s69
      %s71 = sphi 0, %s69
      %s72 = sphi 0, %s71
      %s86 = sphi 0, %s72
      %s90 = sphi 0, %s90
      %s92 = sphi 0, %s90
      %s93 = sphi 0, %s92
      %s107 = sphi 0, %s93
      %s111 = sphi 0, %s111
      %s113 = sphi 0, %s111
      %s114 = sphi 0, %s113
      %s128 = sphi 0, %s114
      %s134 = sphi 0, %s136
      %s137 = sphi 0, %s134
      %s138 = sphi 0, %s137
      %s154 = sphi 0, %s138
    $region4: #{tpu_custom_call.1} parent=1 // loop_header_branch
      %17 = sbr.rel (%p15) target = $region8
    $region5: #{tpu_custom_call.1} parent=1 // loop_body
      %s19 = ssub.s32 %s14, 1
      %s20 = ssub.s32 %s14, 2
      %s21 = sadd.s32 %s14, 1
      %s22 = ssub.s32 %s14, %s21
      %p23 = scmp.eq.s32.totalorder %s22, 0
      %s25 = sadd.s32 %s24, 1
      %s26 = scalar_select %p23, %s24, %s25
      %p29 = pneg %p23
      %p30 = scmp.eq.s32.totalorder %s14, 1
      %p31 = por %p29, %p30
      %p32 = scmp.ne.s32.totalorder %s24, %s27
      %p33 = scmp.eq.s32.totalorder %s14, 0
      %p34 = por %p32, %p33
      %p35 = scmp.ne.s32.totalorder %s24, %s27
      %p36 = scmp.eq.s32.totalorder %s19, 1
      %p37 = por %p35, %p36
      %p38 = scmp.ne.s32.totalorder %s27, %s28
      %p39 = scmp.eq.s32.totalorder %s19, 0
      %p40 = por %p38, %p39
      %p41 = scmp.ne.s32.totalorder %s27, %s28
      %p42 = scmp.eq.s32.totalorder %s20, 1
      %p43 = por %p41, %p42
      %p45 = scmp.ne.s32.totalorder %s28, %s44
      %p46 = scmp.eq.s32.totalorder %s20, 0
      %p47 = por %p45, %p46
      %s49 = sadd.s32 %s48, 1
      %p52 = scmp.eq.s32.totalorder %s14, 1
      %p53 = scmp.ne.s32.totalorder %s48, %s50
      %p54 = scmp.eq.s32.totalorder %s14, 0
      %p55 = por %p53, %p54
      %p56 = scmp.ne.s32.totalorder %s48, %s50
      %p57 = scmp.eq.s32.totalorder %s19, 1
      %p58 = por %p56, %p57
      %p59 = scmp.ne.s32.totalorder %s50, %s51
      %p60 = scmp.eq.s32.totalorder %s19, 0
      %p61 = por %p59, %p60
      %p62 = scmp.ne.s32.totalorder %s50, %s51
      %p63 = scmp.eq.s32.totalorder %s20, 1
      %p64 = por %p62, %p63
      %p66 = scmp.ne.s32.totalorder %s51, %s65
      %p67 = scmp.eq.s32.totalorder %s20, 0
      %p68 = por %p66, %p67
      %s70 = sadd.s32 %s69, 1
      %p73 = scmp.eq.s32.totalorder %s14, 1
      %p74 = scmp.ne.s32.totalorder %s69, %s71
      %p75 = scmp.eq.s32.totalorder %s14, 0
      %p76 = por %p74, %p75
      %p77 = scmp.ne.s32.totalorder %s69, %s71
      %p78 = scmp.eq.s32.totalorder %s19, 1
      %p79 = por %p77, %p78
      %p80 = scmp.ne.s32.totalorder %s71, %s72
      %p81 = scmp.eq.s32.totalorder %s19, 0
      %p82 = por %p80, %p81
      %p83 = scmp.ne.s32.totalorder %s71, %s72
      %p84 = scmp.eq.s32.totalorder %s20, 1
      %p85 = por %p83, %p84
      %p87 = scmp.ne.s32.totalorder %s72, %s86
      %p88 = scmp.eq.s32.totalorder %s20, 0
      %p89 = por %p87, %p88
      %s91 = sadd.s32 %s90, 1
      %p94 = scmp.eq.s32.totalorder %s14, 1
      %p95 = scmp.ne.s32.totalorder %s90, %s92
      %p96 = scmp.eq.s32.totalorder %s14, 0
      %p97 = por %p95, %p96
      %p98 = scmp.ne.s32.totalorder %s90, %s92
      %p99 = scmp.eq.s32.totalorder %s19, 1
      %p100 = por %p98, %p99
      %p101 = scmp.ne.s32.totalorder %s92, %s93
      %p102 = scmp.eq.s32.totalorder %s19, 0
      %p103 = por %p101, %p102
      %p104 = scmp.ne.s32.totalorder %s92, %s93
      %p105 = scmp.eq.s32.totalorder %s20, 1
      %p106 = por %p104, %p105
      %p108 = scmp.ne.s32.totalorder %s93, %s107
      %p109 = scmp.eq.s32.totalorder %s20, 0
      %p110 = por %p108, %p109
      %s112 = sadd.s32 %s111, 1
      %p115 = scmp.eq.s32.totalorder %s14, 1
      %p116 = scmp.ne.s32.totalorder %s111, %s113
      %p117 = scmp.eq.s32.totalorder %s14, 0
      %p118 = por %p116, %p117
      %p119 = scmp.ne.s32.totalorder %s111, %s113
      %p120 = scmp.eq.s32.totalorder %s19, 1
      %p121 = por %p119, %p120
      %p122 = scmp.ne.s32.totalorder %s113, %s114
      %p123 = scmp.eq.s32.totalorder %s19, 0
      %p124 = por %p122, %p123
      %p125 = scmp.ne.s32.totalorder %s113, %s114
      %p126 = scmp.eq.s32.totalorder %s20, 1
      %p127 = por %p125, %p126
      %p129 = scmp.ne.s32.totalorder %s114, %s128
      %p130 = scmp.eq.s32.totalorder %s20, 0
      %p131 = por %p129, %p130
      %s132 = ssub.s32 %s14, %s21
      %p133 = scmp.eq.s32.totalorder %s132, 0
      %s135 = sadd.s32 %s134, 1
      %s136 = scalar_select %p133, %s134, %s135
      %p139 = pneg %p133
      %p140 = scmp.eq.s32.totalorder %s14, 1
      %p141 = por %p139, %p140
      %p142 = scmp.ne.s32.totalorder %s134, %s137
      %p143 = scmp.eq.s32.totalorder %s14, 0
      %p144 = por %p142, %p143
      %p145 = scmp.ne.s32.totalorder %s134, %s137
      %p146 = scmp.eq.s32.totalorder %s19, 1
      %p147 = por %p145, %p146
      %p148 = scmp.ne.s32.totalorder %s137, %s138
      %p149 = scmp.eq.s32.totalorder %s19, 0
      %p150 = por %p148, %p149
      %p151 = scmp.ne.s32.totalorder %s137, %s138
      %p152 = scmp.eq.s32.totalorder %s20, 1
      %p153 = por %p151, %p152
      %p155 = scmp.ne.s32.totalorder %s138, %s154
      %p156 = scmp.eq.s32.totalorder %s20, 0
      %p157 = por %p155, %p156
      %p158 = scmp.le.s32.totalorder 1, %s14
      %p159 = scmp.lt.s32.totalorder %s14, 3
      %p160 = pnand %p158, %p159
      %p161 = pneg %p160
      // Predicated region
      $region9: #{tpu_custom_call.1} parent=5 // pred_check
        _
      $region10: #{tpu_custom_call.1} parent=5 // pred_check_branch
        %163 = sbr.rel (%p160) target = $region12
      $region11: #{tpu_custom_call.1} parent=5 // pred_region
        %s164 = ssub.s32 %s14, 1
        // Predicated region
        $region13: #{tpu_custom_call.1} parent=11 // pred_check
          %p165 = pneg %p61
        $region14: #{tpu_custom_call.1} parent=11 // pred_check_branch
          %167 = sbr.rel (%p165) target = $region16
        $region15: #{tpu_custom_call.1} parent=11 // pred_region
          _
        $region16: #{tpu_custom_call.1} parent=11 // pred_fallthru
          _
        // Predicated region
        $region17: #{tpu_custom_call.1} parent=11 // pred_check
          %p168 = pneg %p82
        $region18: #{tpu_custom_call.1} parent=11 // pred_check_branch
          %170 = sbr.rel (%p168) target = $region20
        $region19: #{tpu_custom_call.1} parent=11 // pred_region
          _
        $region20: #{tpu_custom_call.1} parent=11 // pred_fallthru
          _
        // Predicated region
        $region21: #{tpu_custom_call.1} parent=11 // pred_check
          %p171 = pneg %p103
        $region22: #{tpu_custom_call.1} parent=11 // pred_check_branch
          %173 = sbr.rel (%p171) target = $region24
        $region23: #{tpu_custom_call.1} parent=11 // pred_region
          _
        $region24: #{tpu_custom_call.1} parent=11 // pred_fallthru
          _
        // Predicated region
        $region25: #{tpu_custom_call.1} parent=11 // pred_check
          %p174 = pneg %p124
        $region26: #{tpu_custom_call.1} parent=11 // pred_check_branch
          %176 = sbr.rel (%p174) target = $region28
        $region27: #{tpu_custom_call.1} parent=11 // pred_region
          _
        $region28: #{tpu_custom_call.1} parent=11 // pred_fallthru
          _
      $region12: #{tpu_custom_call.1} parent=5 // pred_fallthru
        _
      %p177 = scmp.lt.s32.totalorder %s14, 2
      // Predicated region
      $region29: #{tpu_custom_call.1} parent=5 // pred_check
        %p178 = pneg %p177
      $region30: #{tpu_custom_call.1} parent=5 // pred_check_branch
        %180 = sbr.rel (%p178) target = $region32
      $region31: #{tpu_custom_call.1} parent=5 // pred_region
        // Predicated region
        $region33: #{tpu_custom_call.1} parent=31 // pred_check
          %p181 = pneg %p34
        $region34: #{tpu_custom_call.1} parent=31 // pred_check_branch
          %183 = sbr.rel (%p181) target = $region36
        $region35: #{tpu_custom_call.1} parent=31 // pred_region
          %s184 = smul.u32 20, %s14
          %s185 = ssub.s32 38, %s184
          %p186 = scmp.lt.s32.totalorder %s185, 20
          %s187 = scalar_select %p186, %s185, 20
          %s188 = smul.u32 128, %s187
          %p189 = scmp.lt.s32.totalorder %s184, 37
          %s190 = scalar_select %p189, %s184, 37
          %s191 = smul.addr %s190, 8
          %s192 = scalar_lea.vmem %s0, %s191
          %s193 = smul.u32 20, %s14
          %s194 = ssub.s32 38, %s193
          %p195 = scmp.lt.s32.totalorder %s194, 20
          %s196 = scalar_select %p195, %s194, 20
          %s197 = smul.u32 128, %s196
        $region36: #{tpu_custom_call.1} parent=31 // pred_fallthru
          _
      $region32: #{tpu_custom_call.1} parent=5 // pred_fallthru
        _
      %p198 = scmp.le.s32.totalorder 1, %s14
      %p199 = scmp.lt.s32.totalorder %s14, 3
      %p200 = pnand %p198, %p199
      %p201 = pneg %p200
      // Predicated region
      $region37: #{tpu_custom_call.1} parent=5 // pred_check
        _
      $region38: #{tpu_custom_call.1} parent=5 // pred_check_branch
        %203 = sbr.rel (%p200) target = $region40
      $region39: #{tpu_custom_call.1} parent=5 // pred_region
        %s204 = ssub.s32 %s14, 1
        %s205 = smul.u32 20, %s19
        %s206 = ssub.s32 38, %s205
        %p207 = scmp.lt.s32.totalorder %s206, 20
        %s208 = scalar_select %p207, %s206, 20
        %s209 = smul.u32 128, %s208
        %p210 = scmp.lt.s32.totalorder %s205, 37
        %s211 = scalar_select %p210, %s205, 37
        %s212 = smul.addr %s211, 8
        %s213 = scalar_lea.vmem %s0, %s212
        %p214 = pneg %p40
        %p215 = pneg %p37
        %p216 = pneg %p61
        %p217 = pneg %p58
        %p218 = pneg %p82
        %p219 = pneg %p79
        %p220 = pneg %p103
        %p221 = pneg %p100
        %p222 = pneg %p124
        %p223 = pneg %p121
        %p224 = pneg %p150
        %p225 = pneg %p147
        %s226 = sand.u32 %s137, 1
        %s227 = scalar_lea.sflag [#allocation3], %s226
        %s228 = sand.u32 %s137, 1
        %s229 = smul.addr %s228, 160
        %s230 = scalar_lea.vmem [#allocation2], %s229
        %s231 = smul.u32 20, %s19
        %s232 = ssub.s32 38, %s231
        %p233 = scmp.lt.s32.totalorder %s232, 20
        %s234 = scalar_select %p233, %s232, 20
        %s235 = smul.u32 128, %s234
        %p236 = scmp.lt.s32.totalorder %s231, 37
        %s237 = scalar_select %p236, %s231, 37
        %s238 = smul.addr %s237, 8
        %s239 = scalar_lea.vmem %s0, %s238
        %s240 = smul.u32 20, %s19
        %s241 = ssub.s32 38, %s240
        %p242 = scmp.lt.s32.totalorder %s241, 20
        %s243 = scalar_select %p242, %s241, 20
        %s244 = smul.u32 128, %s243
        %s245 = smul.u32 20, %s19
        %s246 = ssub.s32 38, %s245
        %p247 = scmp.lt.s32.totalorder %s246, 20
        %s248 = scalar_select %p247, %s246, 20
        %s249 = smul.u32 128, %s248
        %v250 = vld [vmem:[%s239] sm:$0xff]
        %v251 = vld [vmem:[%s239 + $0x8] sm:$0xff]
        %v252 = vld [vmem:[%s239 + $0x10] sm:$0xff]
        %v253 = vld [vmem:[%s239 + $0x18] sm:$0xff]
        %v254 = vld [vmem:[%s239 + $0x20] sm:$0xff]
        %v255 = vld [vmem:[%s239 + $0x28] sm:$0xff]
        %v256 = vld [vmem:[%s239 + $0x30] sm:$0xff]
        %v257 = vld [vmem:[%s239 + $0x38] sm:$0xff]
        %v258 = vld [vmem:[%s239 + $0x40] sm:$0xff]
        %v259 = vld [vmem:[%s239 + $0x48] sm:$0xff]
        %v260 = vld [vmem:[%s239 + $0x50] sm:$0xff]
        %v261 = vld [vmem:[%s239 + $0x58] sm:$0xff]
        %v262 = vld [vmem:[%s239 + $0x60] sm:$0xff]
        %v263 = vld [vmem:[%s239 + $0x68] sm:$0xff]
        %v264 = vld [vmem:[%s239 + $0x70] sm:$0xff]
        %v265 = vld [vmem:[%s239 + $0x78] sm:$0xff]
        %v266 = vld [vmem:[%s239 + $0x80] sm:$0xff]
        %v267 = vld [vmem:[%s239 + $0x88] sm:$0xff]
        %v268 = vld [vmem:[%s239 + $0x90] sm:$0xff]
        %v269 = vld [vmem:[%s239 + $0x98] sm:$0xff]
        %v270 = vld [vmem:[%s1] sm:$0xff]
        %v271 = vld [vmem:[%s1 + $0x8] sm:$0xff]
        %v272 = vld [vmem:[%s1 + $0x10] sm:$0xff]
        %v273 = vld [vmem:[%s1 + $0x18] sm:$0xff]
        %v274 = vld [vmem:[%s2] sm:$0x1]
        %v276 = vlaneseq
        %v277 = vshrl.u32 %v276, 7
        %v278 = vsub.s32 0, %v277
        %v279 = vrot.slane %v274, %v278
        %vm281 = vcmask 261120
        %v283 = vsel %vm281, %v250, 0
        %v286 = vsel %vm281, %v251, 0
        %v289 = vsel %vm281, %v252, 0
        %v292 = vsel %vm281, %v253, 0
        %v295 = vsel %vm281, %v254, 0
        %v298 = vsel %vm281, %v255, 0
        %v301 = vsel %vm281, %v256, 0
        %v304 = vsel %vm281, %v257, 0
        %v307 = vsel %vm281, %v258, 0
        %v310 = vsel %vm281, %v259, 0
        %v313 = vsel %vm281, %v260, 0
        %v316 = vsel %vm281, %v261, 0
        %v319 = vsel %vm281, %v262, 0
        %v322 = vsel %vm281, %v263, 0
        %v325 = vsel %vm281, %v264, 0
        %v328 = vsel %vm281, %v265, 0
        %v331 = vsel %vm281, %v266, 0
        %v334 = vsel %vm281, %v267, 0
        %v337 = vsel %vm281, %v268, 0
        %v340 = vsel %vm281, %v269, 0
        %342 = vmatprep.subr.mxu0 0.0
        %343 = vmatpush1.msra.mxu0 0.0
        %344 = vmatprep.subr.mxu0 0.0
        %345 = vmatpush1.msra.mxu0 0.0
        %346 = vmatprep.subr.mxu0 0.0
        %347 = vmatpush1.msra.mxu0 0.0
        %348 = vmatprep.subr.mxu0 0.0
        %349 = vmatpush1.msra.mxu0 0.0
        %350 = vmatprep.subr.mxu0 0.0
        %351 = vmatpush1.msra.mxu0 0.0
        %352 = vmatprep.subr.mxu0 0.0
        %353 = vmatpush1.msra.mxu0 0.0
        %354 = vmatprep.subr.mxu0 0.0
        %355 = vmatpush1.msra.mxu0 0.0
        %356 = vmatprep.subr.mxu0 0.0
        %357 = vmatpush1.msra.mxu0 0.0
        %358 = vmatprep.subr.mxu0 0.0
        %359 = vmatpush1.msra.mxu0 0.0
        %360 = vmatprep.subr.mxu0 0.0
        %361 = vmatpush1.msra.mxu0 0.0
        %362 = vmatprep.subr.mxu0 0.0
        %363 = vmatpush1.msra.mxu0 0.0
        %364 = vmatprep.subr.mxu0 0.0
        %365 = vmatpush1.msra.mxu0 0.0
        %366 = vmatprep.subr.mxu0 0.0
        %367 = vmatpush1.msra.mxu0 %v273
        %368 = vmatprep.subr.mxu0 0.0
        %369 = vmatpush1.msra.mxu0 %v272
        %370 = vmatprep.subr.mxu0 0.0
        %371 = vmatpush1.msra.mxu0 %v271
        %372 = vmatprep.subr.mxu0 0.0
        %373 = vmatpush1.msra.mxu0 %v270
        %374 = vmatprep.subr.mxu0 0.0
        %375 = vmatpush2.msra.mxu0 0.0
        %376 = vmatprep.subr.mxu0 0.0
        %377 = vmatpush2.msra.mxu0 0.0
        %378 = vmatprep.subr.mxu0 0.0
        %379 = vmatpush2.msra.mxu0 0.0
        %380 = vmatprep.subr.mxu0 0.0
        %381 = vmatpush2.msra.mxu0 0.0
        %382 = vmatprep.subr.mxu0 0.0
        %383 = vmatpush2.msra.mxu0 0.0
        %384 = vmatprep.subr.mxu0 0.0
        %385 = vmatpush2.msra.mxu0 0.0
        %386 = vmatprep.subr.mxu0 0.0
        %387 = vmatpush2.msra.mxu0 0.0
        %388 = vmatprep.subr.mxu0 0.0
        %389 = vmatpush2.msra.mxu0 0.0
        %390 = vmatprep.subr.mxu0 0.0
        %391 = vmatpush2.msra.mxu0 0.0
        %392 = vmatprep.subr.mxu0 0.0
        %393 = vmatpush2.msra.mxu0 0.0
        %394 = vmatprep.subr.mxu0 0.0
        %395 = vmatpush2.msra.mxu0 0.0
        %396 = vmatprep.subr.mxu0 0.0
        %397 = vmatpush2.msra.mxu0 0.0
        %398 = vmatprep.subr.mxu0 0.0
        %399 = vmatpush2.msra.mxu0 0.0
        %400 = vmatprep.subr.mxu0 0.0
        %401 = vmatpush2.msra.mxu0 0.0
        %402 = vmatprep.subr.mxu0 0.0
        %403 = vmatpush2.msra.mxu0 0.0
        %404 = vmatprep.subr.mxu0 0.0
        %405 = vmatpush2.msra.mxu0 0.0
        %406 = vmatprep.mubr.f32.mxu0 0.0
        %407 = vmatmul.mubr.f32.gmra.mxu0 %v283
        %v408 = vpop.f32.mrf.mxu0
        %v409 = vadd.f32 %v279, %v408
        %v410 = vpop.f32.mrf.mxu0
        %411 = vmatprep.mubr.f32.mxu0 0.0
        %412 = vmatmul.mubr.f32.gmra.mxu0 %v286
        %v413 = vpop.f32.mrf.mxu0
        %v414 = vadd.f32 %v279, %v413
        %v415 = vpop.f32.mrf.mxu0
        %416 = vmatprep.mubr.f32.mxu0 0.0
        %417 = vmatmul.mubr.f32.gmra.mxu0 %v289
        %v418 = vpop.f32.mrf.mxu0
        %v419 = vadd.f32 %v279, %v418
        %v420 = vpop.f32.mrf.mxu0
        %421 = vmatprep.mubr.f32.mxu0 0.0
        %422 = vmatmul.mubr.f32.gmra.mxu0 %v292
        %v423 = vpop.f32.mrf.mxu0
        %v424 = vadd.f32 %v279, %v423
        %v425 = vpop.f32.mrf.mxu0
        %426 = vmatprep.mubr.f32.mxu0 0.0
        %427 = vmatmul.mubr.f32.gmra.mxu0 %v295
        %v428 = vpop.f32.mrf.mxu0
        %v429 = vadd.f32 %v279, %v428
        %v430 = vpop.f32.mrf.mxu0
        %431 = vmatprep.mubr.f32.mxu0 0.0
        %432 = vmatmul.mubr.f32.gmra.mxu0 %v298
        %v433 = vpop.f32.mrf.mxu0
        %v434 = vadd.f32 %v279, %v433
        %v435 = vpop.f32.mrf.mxu0
        %436 = vmatprep.mubr.f32.mxu0 0.0
        %437 = vmatmul.mubr.f32.gmra.mxu0 %v301
        %v438 = vpop.f32.mrf.mxu0
        %v439 = vadd.f32 %v279, %v438
        %v440 = vpop.f32.mrf.mxu0
        %441 = vmatprep.mubr.f32.mxu0 0.0
        %442 = vmatmul.mubr.f32.gmra.mxu0 %v304
        %v443 = vpop.f32.mrf.mxu0
        %v444 = vadd.f32 %v279, %v443
        %v445 = vpop.f32.mrf.mxu0
        %446 = vmatprep.mubr.f32.mxu0 0.0
        %447 = vmatmul.mubr.f32.gmra.mxu0 %v307
        %v448 = vpop.f32.mrf.mxu0
        %v449 = vadd.f32 %v279, %v448
        %v450 = vpop.f32.mrf.mxu0
        %451 = vmatprep.mubr.f32.mxu0 0.0
        %452 = vmatmul.mubr.f32.gmra.mxu0 %v310
        %v453 = vpop.f32.mrf.mxu0
        %v454 = vadd.f32 %v279, %v453
        %v455 = vpop.f32.mrf.mxu0
        %456 = vmatprep.mubr.f32.mxu0 0.0
        %457 = vmatmul.mubr.f32.gmra.mxu0 %v313
        %v458 = vpop.f32.mrf.mxu0
        %v459 = vadd.f32 %v279, %v458
        %v460 = vpop.f32.mrf.mxu0
        %461 = vmatprep.mubr.f32.mxu0 0.0
        %462 = vmatmul.mubr.f32.gmra.mxu0 %v316
        %v463 = vpop.f32.mrf.mxu0
        %v464 = vadd.f32 %v279, %v463
        %v465 = vpop.f32.mrf.mxu0
        %466 = vmatprep.mubr.f32.mxu0 0.0
        %467 = vmatmul.mubr.f32.gmra.mxu0 %v319
        %v468 = vpop.f32.mrf.mxu0
        %v469 = vadd.f32 %v279, %v468
        %v470 = vpop.f32.mrf.mxu0
        %471 = vmatprep.mubr.f32.mxu0 0.0
        %472 = vmatmul.mubr.f32.gmra.mxu0 %v322
        %v473 = vpop.f32.mrf.mxu0
        %v474 = vadd.f32 %v279, %v473
        %v475 = vpop.f32.mrf.mxu0
        %476 = vmatprep.mubr.f32.mxu0 0.0
        %477 = vmatmul.mubr.f32.gmra.mxu0 %v325
        %v478 = vpop.f32.mrf.mxu0
        %v479 = vadd.f32 %v279, %v478
        %v480 = vpop.f32.mrf.mxu0
        %481 = vmatprep.mubr.f32.mxu0 0.0
        %482 = vmatmul.mubr.f32.gmra.mxu0 %v328
        %v483 = vpop.f32.mrf.mxu0
        %v484 = vadd.f32 %v279, %v483
        %v485 = vpop.f32.mrf.mxu0
        %486 = vmatprep.mubr.f32.mxu0 0.0
        %487 = vmatmul.mubr.f32.gmra.mxu0 %v331
        %v488 = vpop.f32.mrf.mxu0
        %v489 = vadd.f32 %v279, %v488
        %v490 = vpop.f32.mrf.mxu0
        %491 = vmatprep.mubr.f32.mxu0 0.0
        %492 = vmatmul.mubr.f32.gmra.mxu0 %v334
        %v493 = vpop.f32.mrf.mxu0
        %v494 = vadd.f32 %v279, %v493
        %v495 = vpop.f32.mrf.mxu0
        %496 = vmatprep.mubr.f32.mxu0 0.0
        %497 = vmatmul.mubr.f32.gmra.mxu0 %v337
        %v498 = vpop.f32.mrf.mxu0
        %v499 = vadd.f32 %v279, %v498
        %v500 = vpop.f32.mrf.mxu0
        %501 = vmatprep.mubr.f32.mxu0 0.0
        %502 = vmatmul.mubr.f32.gmra.mxu0 %v340
        %v503 = vpop.f32.mrf.mxu0
        %v504 = vadd.f32 %v279, %v503
        %v505 = vpop.f32.mrf.mxu0
        %506 = vdwg.mxu0
        %v507 = vmax.f32 %v409, 0.0
        %v508 = vmax.f32 %v414, 0.0
        %v509 = vmax.f32 %v419, 0.0
        %v510 = vmax.f32 %v424, 0.0
        %v511 = vmax.f32 %v429, 0.0
        %v512 = vmax.f32 %v434, 0.0
        %v513 = vmax.f32 %v439, 0.0
        %v514 = vmax.f32 %v444, 0.0
        %v515 = vmax.f32 %v449, 0.0
        %v516 = vmax.f32 %v454, 0.0
        %v517 = vmax.f32 %v459, 0.0
        %v518 = vmax.f32 %v464, 0.0
        %v519 = vmax.f32 %v469, 0.0
        %v520 = vmax.f32 %v474, 0.0
        %v521 = vmax.f32 %v479, 0.0
        %v522 = vmax.f32 %v484, 0.0
        %v523 = vmax.f32 %v489, 0.0
        %v524 = vmax.f32 %v494, 0.0
        %v525 = vmax.f32 %v499, 0.0
        %v526 = vmax.f32 %v504, 0.0
        %v527 = vld [vmem:[%s3] sm:$0xff]
        %v528 = vld [vmem:[%s3 + $0x8] sm:$0xff]
        %v529 = vld [vmem:[%s3 + $0x10] sm:$0xff]
        %v530 = vld [vmem:[%s3 + $0x18] sm:$0xff]
        %v531 = vld [vmem:[%s3 + $0x20] sm:$0xff]
        %v532 = vld [vmem:[%s3 + $0x28] sm:$0xff]
        %v533 = vld [vmem:[%s3 + $0x30] sm:$0xff]
        %v534 = vld [vmem:[%s3 + $0x38] sm:$0xff]
        %v535 = vld [vmem:[%s4] sm:$0x1]
        %v537 = vlaneseq
        %v538 = vshrl.u32 %v537, 7
        %v539 = vsub.s32 0, %v538
        %v540 = vrot.slane %v535, %v539
        %vm542 = vcmask 523264
        %v544 = vsel %vm542, %v507, 0
        %v547 = vsel %vm542, %v508, 0
        %v550 = vsel %vm542, %v509, 0
        %v553 = vsel %vm542, %v510, 0
        %v556 = vsel %vm542, %v511, 0
        %v559 = vsel %vm542, %v512, 0
        %v562 = vsel %vm542, %v513, 0
        %v565 = vsel %vm542, %v514, 0
        %v568 = vsel %vm542, %v515, 0
        %v571 = vsel %vm542, %v516, 0
        %v574 = vsel %vm542, %v517, 0
        %v577 = vsel %vm542, %v518, 0
        %v580 = vsel %vm542, %v519, 0
        %v583 = vsel %vm542, %v520, 0
        %v586 = vsel %vm542, %v521, 0
        %v589 = vsel %vm542, %v522, 0
        %v592 = vsel %vm542, %v523, 0
        %v595 = vsel %vm542, %v524, 0
        %v598 = vsel %vm542, %v525, 0
        %v601 = vsel %vm542, %v526, 0
        %603 = vmatprep.subr.mxu0 0.0
        %604 = vmatpush1.msra.mxu0 0.0
        %605 = vmatprep.subr.mxu0 0.0
        %606 = vmatpush1.msra.mxu0 0.0
        %607 = vmatprep.subr.mxu0 0.0
        %608 = vmatpush1.msra.mxu0 0.0
        %609 = vmatprep.subr.mxu0 0.0
        %610 = vmatpush1.msra.mxu0 0.0
        %611 = vmatprep.subr.mxu0 0.0
        %612 = vmatpush1.msra.mxu0 0.0
        %613 = vmatprep.subr.mxu0 0.0
        %614 = vmatpush1.msra.mxu0 0.0
        %615 = vmatprep.subr.mxu0 0.0
        %616 = vmatpush1.msra.mxu0 0.0
        %617 = vmatprep.subr.mxu0 0.0
        %618 = vmatpush1.msra.mxu0 0.0
        %619 = vmatprep.subr.mxu0 0.0
        %620 = vmatpush1.msra.mxu0 %v534
        %621 = vmatprep.subr.mxu0 0.0
        %622 = vmatpush1.msra.mxu0 %v533
        %623 = vmatprep.subr.mxu0 0.0
        %624 = vmatpush1.msra.mxu0 %v532
        %625 = vmatprep.subr.mxu0 0.0
        %626 = vmatpush1.msra.mxu0 %v531
        %627 = vmatprep.subr.mxu0 0.0
        %628 = vmatpush1.msra.mxu0 %v530
        %629 = vmatprep.subr.mxu0 0.0
        %630 = vmatpush1.msra.mxu0 %v529
        %631 = vmatprep.subr.mxu0 0.0
        %632 = vmatpush1.msra.mxu0 %v528
        %633 = vmatprep.subr.mxu0 0.0
        %634 = vmatpush1.msra.mxu0 %v527
        %635 = vmatprep.subr.mxu0 0.0
        %636 = vmatpush2.msra.mxu0 0.0
        %637 = vmatprep.subr.mxu0 0.0
        %638 = vmatpush2.msra.mxu0 0.0
        %639 = vmatprep.subr.mxu0 0.0
        %640 = vmatpush2.msra.mxu0 0.0
        %641 = vmatprep.subr.mxu0 0.0
        %642 = vmatpush2.msra.mxu0 0.0
        %643 = vmatprep.subr.mxu0 0.0
        %644 = vmatpush2.msra.mxu0 0.0
        %645 = vmatprep.subr.mxu0 0.0
        %646 = vmatpush2.msra.mxu0 0.0
        %647 = vmatprep.subr.mxu0 0.0
        %648 = vmatpush2.msra.mxu0 0.0
        %649 = vmatprep.subr.mxu0 0.0
        %650 = vmatpush2.msra.mxu0 0.0
        %651 = vmatprep.subr.mxu0 0.0
        %652 = vmatpush2.msra.mxu0 0.0
        %653 = vmatprep.subr.mxu0 0.0
        %654 = vmatpush2.msra.mxu0 0.0
        %655 = vmatprep.subr.mxu0 0.0
        %656 = vmatpush2.msra.mxu0 0.0
        %657 = vmatprep.subr.mxu0 0.0
        %658 = vmatpush2.msra.mxu0 0.0
        %659 = vmatprep.subr.mxu0 0.0
        %660 = vmatpush2.msra.mxu0 0.0
        %661 = vmatprep.subr.mxu0 0.0
        %662 = vmatpush2.msra.mxu0 0.0
        %663 = vmatprep.subr.mxu0 0.0
        %664 = vmatpush2.msra.mxu0 0.0
        %665 = vmatprep.subr.mxu0 0.0
        %666 = vmatpush2.msra.mxu0 0.0
        %667 = vmatprep.mubr.f32.mxu0 0.0
        %668 = vmatmul.mubr.f32.gmra.mxu0 %v544
        %v669 = vpop.f32.mrf.mxu0
        %v670 = vadd.f32 %v540, %v669
        %v671 = vpop.f32.mrf.mxu0
        %672 = vmatprep.mubr.f32.mxu0 0.0
        %673 = vmatmul.mubr.f32.gmra.mxu0 %v547
        %v674 = vpop.f32.mrf.mxu0
        %v675 = vadd.f32 %v540, %v674
        %v676 = vpop.f32.mrf.mxu0
        %677 = vmatprep.mubr.f32.mxu0 0.0
        %678 = vmatmul.mubr.f32.gmra.mxu0 %v550
        %v679 = vpop.f32.mrf.mxu0
        %v680 = vadd.f32 %v540, %v679
        %v681 = vpop.f32.mrf.mxu0
        %682 = vmatprep.mubr.f32.mxu0 0.0
        %683 = vmatmul.mubr.f32.gmra.mxu0 %v553
        %v684 = vpop.f32.mrf.mxu0
        %v685 = vadd.f32 %v540, %v684
        %v686 = vpop.f32.mrf.mxu0
        %687 = vmatprep.mubr.f32.mxu0 0.0
        %688 = vmatmul.mubr.f32.gmra.mxu0 %v556
        %v689 = vpop.f32.mrf.mxu0
        %v690 = vadd.f32 %v540, %v689
        %v691 = vpop.f32.mrf.mxu0
        %692 = vmatprep.mubr.f32.mxu0 0.0
        %693 = vmatmul.mubr.f32.gmra.mxu0 %v559
        %v694 = vpop.f32.mrf.mxu0
        %v695 = vadd.f32 %v540, %v694
        %v696 = vpop.f32.mrf.mxu0
        %697 = vmatprep.mubr.f32.mxu0 0.0
        %698 = vmatmul.mubr.f32.gmra.mxu0 %v562
        %v699 = vpop.f32.mrf.mxu0
        %v700 = vadd.f32 %v540, %v699
        %v701 = vpop.f32.mrf.mxu0
        %702 = vmatprep.mubr.f32.mxu0 0.0
        %703 = vmatmul.mubr.f32.gmra.mxu0 %v565
        %v704 = vpop.f32.mrf.mxu0
        %v705 = vadd.f32 %v540, %v704
        %v706 = vpop.f32.mrf.mxu0
        %707 = vmatprep.mubr.f32.mxu0 0.0
        %708 = vmatmul.mubr.f32.gmra.mxu0 %v568
        %v709 = vpop.f32.mrf.mxu0
        %v710 = vadd.f32 %v540, %v709
        %v711 = vpop.f32.mrf.mxu0
        %712 = vmatprep.mubr.f32.mxu0 0.0
        %713 = vmatmul.mubr.f32.gmra.mxu0 %v571
        %v714 = vpop.f32.mrf.mxu0
        %v715 = vadd.f32 %v540, %v714
        %v716 = vpop.f32.mrf.mxu0
        %717 = vmatprep.mubr.f32.mxu0 0.0
        %718 = vmatmul.mubr.f32.gmra.mxu0 %v574
        %v719 = vpop.f32.mrf.mxu0
        %v720 = vadd.f32 %v540, %v719
        %v721 = vpop.f32.mrf.mxu0
        %722 = vmatprep.mubr.f32.mxu0 0.0
        %723 = vmatmul.mubr.f32.gmra.mxu0 %v577
        %v724 = vpop.f32.mrf.mxu0
        %v725 = vadd.f32 %v540, %v724
        %v726 = vpop.f32.mrf.mxu0
        %727 = vmatprep.mubr.f32.mxu0 0.0
        %728 = vmatmul.mubr.f32.gmra.mxu0 %v580
        %v729 = vpop.f32.mrf.mxu0
        %v730 = vadd.f32 %v540, %v729
        %v731 = vpop.f32.mrf.mxu0
        %732 = vmatprep.mubr.f32.mxu0 0.0
        %733 = vmatmul.mubr.f32.gmra.mxu0 %v583
        %v734 = vpop.f32.mrf.mxu0
        %v735 = vadd.f32 %v540, %v734
        %v736 = vpop.f32.mrf.mxu0
        %737 = vmatprep.mubr.f32.mxu0 0.0
        %738 = vmatmul.mubr.f32.gmra.mxu0 %v586
        %v739 = vpop.f32.mrf.mxu0
        %v740 = vadd.f32 %v540, %v739
        %v741 = vpop.f32.mrf.mxu0
        %742 = vmatprep.mubr.f32.mxu0 0.0
        %743 = vmatmul.mubr.f32.gmra.mxu0 %v589
        %v744 = vpop.f32.mrf.mxu0
        %v745 = vadd.f32 %v540, %v744
        %v746 = vpop.f32.mrf.mxu0
        %747 = vmatprep.mubr.f32.mxu0 0.0
        %748 = vmatmul.mubr.f32.gmra.mxu0 %v592
        %v749 = vpop.f32.mrf.mxu0
        %v750 = vadd.f32 %v540, %v749
        %v751 = vpop.f32.mrf.mxu0
        %752 = vmatprep.mubr.f32.mxu0 0.0
        %753 = vmatmul.mubr.f32.gmra.mxu0 %v595
        %v754 = vpop.f32.mrf.mxu0
        %v755 = vadd.f32 %v540, %v754
        %v756 = vpop.f32.mrf.mxu0
        %757 = vmatprep.mubr.f32.mxu0 0.0
        %758 = vmatmul.mubr.f32.gmra.mxu0 %v598
        %v759 = vpop.f32.mrf.mxu0
        %v760 = vadd.f32 %v540, %v759
        %v761 = vpop.f32.mrf.mxu0
        %762 = vmatprep.mubr.f32.mxu0 0.0
        %763 = vmatmul.mubr.f32.gmra.mxu0 %v601
        %v764 = vpop.f32.mrf.mxu0
        %v765 = vadd.f32 %v540, %v764
        %v766 = vpop.f32.mrf.mxu0
        %767 = vdwg.mxu0
        %v768 = vsub.f32 0.0, %v670
        %v769 = vsub.f32 0.0, %v675
        %v770 = vsub.f32 0.0, %v680
        %v771 = vsub.f32 0.0, %v685
        %v772 = vsub.f32 0.0, %v690
        %v773 = vsub.f32 0.0, %v695
        %v774 = vsub.f32 0.0, %v700
        %v775 = vsub.f32 0.0, %v705
        %v776 = vsub.f32 0.0, %v710
        %v777 = vsub.f32 0.0, %v715
        %v778 = vsub.f32 0.0, %v720
        %v779 = vsub.f32 0.0, %v725
        %v780 = vsub.f32 0.0, %v730
        %v781 = vsub.f32 0.0, %v735
        %v782 = vsub.f32 0.0, %v740
        %v783 = vsub.f32 0.0, %v745
        %v784 = vsub.f32 0.0, %v750
        %v785 = vsub.f32 0.0, %v755
        %v786 = vsub.f32 0.0, %v760
        %v787 = vsub.f32 0.0, %v765
        %v788 = vmul.f32 %v768, 1.442695
        %v789 = vpow.pop %v788
        %v790 = vmul.f32 %v769, 1.442695
        %v791 = vpow.pop %v790
        %v792 = vmul.f32 %v770, 1.442695
        %v793 = vpow.pop %v792
        %v794 = vmul.f32 %v771, 1.442695
        %v795 = vpow.pop %v794
        %v796 = vmul.f32 %v772, 1.442695
        %v797 = vpow.pop %v796
        %v798 = vmul.f32 %v773, 1.442695
        %v799 = vpow.pop %v798
        %v800 = vmul.f32 %v774, 1.442695
        %v801 = vpow.pop %v800
        %v802 = vmul.f32 %v775, 1.442695
        %v803 = vpow.pop %v802
        %v804 = vmul.f32 %v776, 1.442695
        %v805 = vpow.pop %v804
        %v806 = vmul.f32 %v777, 1.442695
        %v807 = vpow.pop %v806
        %v808 = vmul.f32 %v778, 1.442695
        %v809 = vpow.pop %v808
        %v810 = vmul.f32 %v779, 1.442695
        %v811 = vpow.pop %v810
        %v812 = vmul.f32 %v780, 1.442695
        %v813 = vpow.pop %v812
        %v814 = vmul.f32 %v781, 1.442695
        %v815 = vpow.pop %v814
        %v816 = vmul.f32 %v782, 1.442695
        %v817 = vpow.pop %v816
        %v818 = vmul.f32 %v783, 1.442695
        %v819 = vpow.pop %v818
        %v820 = vmul.f32 %v784, 1.442695
        %v821 = vpow.pop %v820
        %v822 = vmul.f32 %v785, 1.442695
        %v823 = vpow.pop %v822
        %v824 = vmul.f32 %v786, 1.442695
        %v825 = vpow.pop %v824
        %v826 = vmul.f32 %v787, 1.442695
        %v827 = vpow.pop %v826
        %v828 = vadd.f32 %v789, 1.0
        %v829 = vadd.f32 %v791, 1.0
        %v830 = vadd.f32 %v793, 1.0
        %v831 = vadd.f32 %v795, 1.0
        %v832 = vadd.f32 %v797, 1.0
        %v833 = vadd.f32 %v799, 1.0
        %v834 = vadd.f32 %v801, 1.0
        %v835 = vadd.f32 %v803, 1.0
        %v836 = vadd.f32 %v805, 1.0
        %v837 = vadd.f32 %v807, 1.0
        %v838 = vadd.f32 %v809, 1.0
        %v839 = vadd.f32 %v811, 1.0
        %v840 = vadd.f32 %v813, 1.0
        %v841 = vadd.f32 %v815, 1.0
        %v842 = vadd.f32 %v817, 1.0
        %v843 = vadd.f32 %v819, 1.0
        %v844 = vadd.f32 %v821, 1.0
        %v845 = vadd.f32 %v823, 1.0
        %v846 = vadd.f32 %v825, 1.0
        %v847 = vadd.f32 %v827, 1.0
        %v848 = vrcp.pop %v828
        %v849 = vrcp.pop %v829
        %v850 = vrcp.pop %v830
        %v851 = vrcp.pop %v831
        %v852 = vrcp.pop %v832
        %v853 = vrcp.pop %v833
        %v854 = vrcp.pop %v834
        %v855 = vrcp.pop %v835
        %v856 = vrcp.pop %v836
        %v857 = vrcp.pop %v837
        %v858 = vrcp.pop %v838
        %v859 = vrcp.pop %v839
        %v860 = vrcp.pop %v840
        %v861 = vrcp.pop %v841
        %v862 = vrcp.pop %v842
        %v863 = vrcp.pop %v843
        %v864 = vrcp.pop %v844
        %v865 = vrcp.pop %v845
        %v866 = vrcp.pop %v846
        %v867 = vrcp.pop %v847
        %868 = vst [vmem:[%s230] sm:$0xff] %v848
        %869 = vst [vmem:[%s230 + $0x8] sm:$0xff] %v849
        %870 = vst [vmem:[%s230 + $0x10] sm:$0xff] %v850
        %871 = vst [vmem:[%s230 + $0x18] sm:$0xff] %v851
        %872 = vst [vmem:[%s230 + $0x20] sm:$0xff] %v852
        %873 = vst [vmem:[%s230 + $0x28] sm:$0xff] %v853
        %874 = vst [vmem:[%s230 + $0x30] sm:$0xff] %v854
        %875 = vst [vmem:[%s230 + $0x38] sm:$0xff] %v855
        %876 = vst [vmem:[%s230 + $0x40] sm:$0xff] %v856
        %877 = vst [vmem:[%s230 + $0x48] sm:$0xff] %v857
        %878 = vst [vmem:[%s230 + $0x50] sm:$0xff] %v858
        %879 = vst [vmem:[%s230 + $0x58] sm:$0xff] %v859
        %880 = vst [vmem:[%s230 + $0x60] sm:$0xff] %v860
        %881 = vst [vmem:[%s230 + $0x68] sm:$0xff] %v861
        %882 = vst [vmem:[%s230 + $0x70] sm:$0xff] %v862
        %883 = vst [vmem:[%s230 + $0x78] sm:$0xff] %v863
        %884 = vst [vmem:[%s230 + $0x80] sm:$0xff] %v864
        %885 = vst [vmem:[%s230 + $0x88] sm:$0xff] %v865
        %886 = vst [vmem:[%s230 + $0x90] sm:$0xff] %v866
        %887 = vst [vmem:[%s230 + $0x98] sm:$0xff] %v867
        %s888 = sand.u32 %s137, 1
        %s889 = scalar_lea.sflag [#allocation3], %s888
        %s890 = sand.u32 %s137, 1
        %s891 = smul.addr %s890, 160
        %s892 = scalar_lea.vmem [#allocation2], %s891
        // Predicated region
        $region41: #{tpu_custom_call.1} parent=39 // pred_check
          %p893 = pneg %p147
        $region42: #{tpu_custom_call.1} parent=39 // pred_check_branch
          %895 = sbr.rel (%p893) target = $region44
        $region43: #{tpu_custom_call.1} parent=39 // pred_region
          %s896 = smul.u32 20, %s19
          %s897 = ssub.s32 38, %s896
          %p898 = scmp.lt.s32.totalorder %s897, 20
          %s899 = scalar_select %p898, %s897, 20
          %s900 = smul.u32 128, %s899
          %s902 = ssub.s32 2560, %s900
          %903 = vsyncadd %s889, %s902
          %p904 = scmp.ne.s32.totalorder 0, %s900
          %s905 = smul.addr %s896, 128
          %s906 = scalar_lea.hbm %s5, %s905
          %s907 = smul.u32 8, %s899
          %s908 = sshll.u32 %s892, 4
          %s909 = int_to_ptr.vmem [resolvable:$true] %s908
          %s910 = sshll.u32 %s907, 4
          %914 = dma.vmem_to_hbm [thread:$0]  (%p904), %s909, %s910, %s906, %s889, 128, 128, 8
        $region44: #{tpu_custom_call.1} parent=39 // pred_fallthru
          _
      $region40: #{tpu_custom_call.1} parent=5 // pred_fallthru
        _
      %p915 = scmp.le.s32.totalorder 2, %s14
      // Predicated region
      $region45: #{tpu_custom_call.1} parent=5 // pred_check
        %p916 = pneg %p915
      $region46: #{tpu_custom_call.1} parent=5 // pred_check_branch
        %918 = sbr.rel (%p916) target = $region48
      $region47: #{tpu_custom_call.1} parent=5 // pred_region
        %s919 = ssub.s32 %s14, 2
        // Predicated region
        $region49: #{tpu_custom_call.1} parent=47 // pred_check
          %p920 = pneg %p153
        $region50: #{tpu_custom_call.1} parent=47 // pred_check_branch
          %922 = sbr.rel (%p920) target = $region52
        $region51: #{tpu_custom_call.1} parent=47 // pred_region
          %s923 = sand.u32 %s138, 1
          %s924 = scalar_lea.sflag [#allocation3], %s923
          %s925 = sand.u32 %s138, 1
          %s926 = smul.addr %s925, 160
          %s927 = scalar_lea.vmem [#allocation2], %s926
          %928 = dma.done %s924, 2560
        $region52: #{tpu_custom_call.1} parent=47 // pred_fallthru
          _
      $region48: #{tpu_custom_call.1} parent=5 // pred_fallthru
        _
    $region6: #{tpu_custom_call.1} parent=1 // loop_footer
      %s18 = sadd.s32 1, %s14
    $region7: #{tpu_custom_call.1} parent=1 // loop_footer_branch
      %13 = sbr.rel target = $region3
    $region8: #{tpu_custom_call.1} parent=1 // loop_exit
      _
    %929 = vsyncpa [#allocation3], 1
    %s930 = scalar_lea.sflag [#allocation3], 1
    %931 = vsyncpa %s930, 1

</llo_original>
